<compile_context>
chip_gen: v5e
topology: v5e:2x2
jax: 0.10.0
libtpu: 0.0.40
codegen_flags: <defaults>
</compile_context>

<pallas_src>
import functools
import math

import jax
import jax.numpy as jnp
from jax.experimental import pallas as pl
from jax.experimental.pallas import tpu as pltpu

DROPOUT_P = 0.8
BN_EPS = 1e-5


def _round_up(x, m):
    return (x + m - 1) // m * m


# ------------------------------ encoder kernel ------------------------------- #
def encoder_kernel(x_ref, w1_ref, b1_ref, mask_ref, wh_ref, bh_ref,
                   gamma_ref, beta_ref, out_ref, acc_ref, *, n_topics):
    k = pl.program_id(0)

    @pl.when(k == 0)
    def _():
        acc_ref[...] = jnp.zeros_like(acc_ref)

    # Partial sum of x @ W1 for this K tile (bf16 operands, f32 MXU accumulation).
    acc_ref[...] += jnp.dot(x_ref[...], w1_ref[...],
                            preferred_element_type=jnp.float32)

    @pl.when(k == pl.num_programs(0) - 1)
    def _():
        # tanh + dropout (pre-scaled keep mask supplied by the wrapper).
        h = jnp.tanh(acc_ref[...] + b1_ref[...]) * mask_ref[...]          # (B, H)

        # Fused loc||log_scale head: one matmul, lane-dense padded output.
        pre = jnp.dot(h, wh_ref[...],
                      preferred_element_type=jnp.float32) + bh_ref[...]   # (B, P)

        # BatchNorm1d with batch statistics (biased variance), per column.
        mean = jnp.mean(pre, axis=0, keepdims=True)
        var = jnp.mean((pre - mean) ** 2, axis=0, keepdims=True)
        bn = (pre - mean) * jax.lax.rsqrt(var + BN_EPS) * gamma_ref[...] + beta_ref[...]

        conc = jnp.logaddexp(bn, 0.0)            # softplus(BN(loc(h)))
        rate = 1.0 + jnp.logaddexp(pre, 0.0)     # 1 + softplus(log_scale(h))

        # Columns [0, T) carry conc, columns [T, 2T) carry rate, rest is padding.
        col = jax.lax.broadcasted_iota(jnp.int32, pre.shape, 1)
        out_ref[...] = jnp.where(col < n_topics, conc, rate)


# --------------------------------- wrapper ----------------------------------- #
def make_params(key, vocab_size, n_hidden, n_topics):
    k1, k2, k3, k4 = jax.random.split(key, 4)
    # xavier_uniform for MLP_linear.weight (stored transposed: (V, H))
    b1_bound = math.sqrt(6.0 / (vocab_size + n_hidden))
    W1 = jax.random.uniform(k1, (vocab_size, n_hidden), jnp.float32, -b1_bound, b1_bound)
    b1 = jax.random.uniform(k2, (1, n_hidden), jnp.float32,
                            -1.0 / math.sqrt(vocab_size), 1.0 / math.sqrt(vocab_size))
    # xavier_uniform for loc.weight (stored as (H, T))
    bl_bound = math.sqrt(6.0 / (n_hidden + n_topics))
    W_loc = jax.random.uniform(k3, (n_hidden, n_topics), jnp.float32, -bl_bound, bl_bound)
    b_loc = jax.random.uniform(k4, (1, n_topics), jnp.float32,
                               -1.0 / math.sqrt(n_hidden), 1.0 / math.sqrt(n_hidden))
    # log_scale initialized to zero (weight and bias)
    W_ls = jnp.zeros((n_hidden, n_topics), jnp.float32)
    b_ls = jnp.zeros((1, n_topics), jnp.float32)
    # BatchNorm affine params
    gamma = jnp.ones((1, n_topics), jnp.float32)
    beta = jnp.zeros((1, n_topics), jnp.float32)
    return W1, b1, W_loc, b_loc, W_ls, b_ls, gamma, beta


def inference_network_forward(in_vec, params, n_topics, *,
                              dropout_key, sample_key, tk=256):
    W1, b1, W_loc, b_loc, W_ls, b_ls, gamma, beta = params
    B, V = in_vec.shape
    H = W1.shape[1]
    T = n_topics
    P = max(128, _round_up(2 * T, 128))          # lane-dense fused head width

    # Fuse + lane-pad the two heads: columns [0,T)=loc, [T,2T)=log_scale, rest zero.
    Wh = jnp.zeros((H, P), jnp.float32).at[:, :T].set(W_loc).at[:, T:2 * T].set(W_ls)
    bh = jnp.zeros((1, P), jnp.float32).at[:, :T].set(b_loc).at[:, T:2 * T].set(b_ls)
    gamma_p = jnp.ones((1, P), jnp.float32).at[:, :T].set(gamma)
    beta_p = jnp.zeros((1, P), jnp.float32).at[:, :T].set(beta)

    # Dropout keep mask (training mode), pre-scaled by 1/(1-p).
    # TODO(synk): generated with jax.random in the wrapper instead of pltpu.prng_*
    # (no interpreter lowering for the in-kernel PRNG); semantics are identical.
    u = jax.random.uniform(dropout_key, (B, H), jnp.float32)
    keep_mask = (u >= DROPOUT_P).astype(jnp.float32) * (1.0 / (1.0 - DROPOUT_P))

    # bf16 operands for the K-tiled x @ W1 (f32 accumulation); zero-pad V to tk.
    tk = min(tk, _round_up(V, 128))
    Vp = _round_up(V, tk)
    x_bf = jnp.zeros((B, Vp), jnp.bfloat16).at[:, :V].set(in_vec.astype(jnp.bfloat16))
    w1_bf = jnp.zeros((Vp, H), jnp.bfloat16).at[:V, :].set(W1.astype(jnp.bfloat16))
    nk = Vp // tk

    kernel = functools.partial(encoder_kernel, n_topics=T)

    head = pl.pallas_call(
        kernel,
        out_shape=jax.ShapeDtypeStruct((B, P), jnp.float32),
        grid_spec=pltpu.PrefetchScalarGridSpec(
            num_scalar_prefetch=0,
            grid=(nk,),
            in_specs=[
                pl.BlockSpec((B, tk), lambda k: (0, k)),    # x K-tile
                pl.BlockSpec((tk, H), lambda k: (k, 0)),    # W1 K-tile
                pl.BlockSpec((1, H), lambda k: (0, 0)),     # b1 (resident)
                pl.BlockSpec((B, H), lambda k: (0, 0)),     # dropout keep mask
                pl.BlockSpec((H, P), lambda k: (0, 0)),     # fused head weight
                pl.BlockSpec((1, P), lambda k: (0, 0)),     # fused head bias
                pl.BlockSpec((1, P), lambda k: (0, 0)),     # BN gamma (padded)
                pl.BlockSpec((1, P), lambda k: (0, 0)),     # BN beta (padded)
            ],
            out_specs=pl.BlockSpec((B, P), lambda k: (0, 0)),
            scratch_shapes=[pltpu.VMEM((B, H), jnp.float32)],   # x@W1 accumulator
        ),
        compiler_params=pltpu.CompilerParams(
            dimension_semantics=("arbitrary",),          # K is a reduction axis
            vmem_limit_bytes=48 * 1024 * 1024,           # fits v7x (64 MiB) / v6e / v5e
        ),
    )(x_bf, w1_bf, b1, keep_mask, Wh, bh, gamma_p, beta_p)

    conc = head[:, :T]
    rate = head[:, T:2 * T]

    # TODO(synk): Gamma.rsample (rejection sampling) and LogNormal prior draws have no
    # clean Pallas equivalent; done with jax.random — XLA fuses them with the tiny
    # Sinkhorn reduction below (no extra kernel launch).
    kg, kn = jax.random.split(sample_key)
    alpha = jax.random.gamma(kg, conc) / rate                  # Gamma(conc, rate).rsample()
    beta_prior = jnp.exp(jax.random.normal(kn, (B, T)))        # LogNormal(0, 1) prior

    # geomloss SamplesLoss('sinkhorn', p=2) on single-point clouds == 0.5*||a-b||^2.
    sd = 0.5 * jnp.sum((alpha - beta_prior) ** 2, axis=-1)

    return sd, alpha                                           # (SD, alpha.squeeze())


if __name__ == "__main__":
    B, VOCAB, HIDDEN, TOPICS = 8, 512, 128, 16

    key = jax.random.PRNGKey(0)
    k_params, k_in, k_drop, k_sample = jax.random.split(key, 4)

    params = make_params(k_params, VOCAB, HIDDEN, TOPICS)
    # bag-of-words style non-negative input
    in_vec = jax.random.uniform(k_in, (B, VOCAB), jnp.float32, 0.0, 3.0)

    sd, alpha = inference_network_forward(in_vec, params, TOPICS,
                                          dropout_key=k_drop, sample_key=k_sample)
    jax.block_until_ready((sd, alpha))

    assert sd.shape == (B,)
    assert alpha.shape == (B, TOPICS)
    assert bool(jnp.all(jnp.isfinite(sd)))
    assert bool(jnp.all(jnp.isfinite(alpha))) and bool(jnp.all(alpha >= 0))
    print("KERNEL_OK")
</pallas_src>

<mosaic_0001>
module attributes {stable_mosaic.version = 11 : i64} {
  func.func @encoder_kernel(%arg0: i32, %arg1: memref<8x256xbf16, #tpu.memory_space<vmem>>, %arg2: memref<256x128xbf16, #tpu.memory_space<vmem>>, %arg3: memref<1x128xf32, #tpu.memory_space<vmem>>, %arg4: memref<8x128xf32, #tpu.memory_space<vmem>>, %arg5: memref<128x128xf32, #tpu.memory_space<vmem>>, %arg6: memref<1x128xf32, #tpu.memory_space<vmem>>, %arg7: memref<1x128xf32, #tpu.memory_space<vmem>>, %arg8: memref<1x128xf32, #tpu.memory_space<vmem>>, %arg9: memref<8x128xf32, #tpu.memory_space<vmem>>, %arg10: memref<8x128xf32, #tpu.memory_space<vmem>>) attributes {dimension_semantics = [#tpu.dimension_semantics<arbitrary>], iteration_bounds = array<i64: 2>, scalar_prefetch = 0 : i64, scratch_operands = 1 : i64, tpu.core_type = #tpu.core_type<tc>, window_params = [{transform_indices = @transform_0, window_bounds = array<i64: 8, 256>}, {transform_indices = @transform_1, window_bounds = array<i64: 256, 128>}, {pipeline_mode = #tpu.pipeline_mode<synchronous>, transform_indices = @transform_2, window_bounds = array<i64: 1, 128>}, {pipeline_mode = #tpu.pipeline_mode<synchronous>, transform_indices = @transform_3, window_bounds = array<i64: 8, 128>}, {pipeline_mode = #tpu.pipeline_mode<synchronous>, transform_indices = @transform_4, window_bounds = array<i64: 128, 128>}, {pipeline_mode = #tpu.pipeline_mode<synchronous>, transform_indices = @transform_5, window_bounds = array<i64: 1, 128>}, {pipeline_mode = #tpu.pipeline_mode<synchronous>, transform_indices = @transform_6, window_bounds = array<i64: 1, 128>}, {pipeline_mode = #tpu.pipeline_mode<synchronous>, transform_indices = @transform_7, window_bounds = array<i64: 1, 128>}, {pipeline_mode = #tpu.pipeline_mode<synchronous>, transform_indices = @transform_8, window_bounds = array<i64: 8, 128>}]} {
    %c0_i32 = arith.constant 0 : i32
    %0 = arith.cmpi eq, %arg0, %c0_i32 : i32
    %1 = arith.extui %0 : i1 to i32
    %c0_i32_0 = arith.constant 0 : i32
    %2 = arith.cmpi ne, %1, %c0_i32_0 : i32
    scf.if %2 {
      %cst_9 = arith.constant 0.000000e+00 : f32
      %12 = vector.broadcast %cst_9 : f32 to vector<8x128xf32>
      %c0_10 = arith.constant 0 : index
      %c0_11 = arith.constant 0 : index
      %13 = vector.load %arg10[%c0_10, %c0_11] : memref<8x128xf32, #tpu.memory_space<vmem>>, vector<8x128xf32>
      tpu.vector_store %arg10[%c0_10, %c0_11], %12 {strides = array<i32>} : memref<8x128xf32, #tpu.memory_space<vmem>>, vector<8x128xf32>,
    } else {
    }
    %c0 = arith.constant 0 : index
    %c0_1 = arith.constant 0 : index
    %3 = vector.load %arg10[%c0, %c0_1] : memref<8x128xf32, #tpu.memory_space<vmem>>, vector<8x128xf32>
    %c0_2 = arith.constant 0 : index
    %c0_3 = arith.constant 0 : index
    %4 = vector.load %arg1[%c0_2, %c0_3] : memref<8x256xbf16, #tpu.memory_space<vmem>>, vector<8x256xbf16>
    %c0_4 = arith.constant 0 : index
    %c0_5 = arith.constant 0 : index
    %5 = vector.load %arg2[%c0_4, %c0_5] : memref<256x128xbf16, #tpu.memory_space<vmem>>, vector<256x128xbf16>
    %cst = arith.constant dense<0.000000e+00> : vector<8x128xf32>
    %6 = tpu.matmul %4, %5, %cst {dimension_numbers = #tpu.dot_dimension_numbers<[1], [0], [0], [1], [0, 0, 1, 1], [], []>} : vector<8x256xbf16>, vector<256x128xbf16>, vector<8x128xf32> -> vector<8x128xf32>
    %7 = arith.addf %3, %6 : vector<8x128xf32>
    %c0_6 = arith.constant 0 : index
    %c0_7 = arith.constant 0 : index
    %8 = vector.load %arg10[%c0_6, %c0_7] : memref<8x128xf32, #tpu.memory_space<vmem>>, vector<8x128xf32>
    tpu.vector_store %arg10[%c0_6, %c0_7], %7 {strides = array<i32>} : memref<8x128xf32, #tpu.memory_space<vmem>>, vector<8x128xf32>,
    %c1_i32 = arith.constant 1 : i32
    %9 = arith.cmpi eq, %arg0, %c1_i32 : i32
    %10 = arith.extui %9 : i1 to i32
    %c0_i32_8 = arith.constant 0 : i32
    %11 = arith.cmpi ne, %10, %c0_i32_8 : i32
    scf.if %11 {
      %c0_9 = arith.constant 0 : index
      %c0_10 = arith.constant 0 : index
      %12 = vector.load %arg10[%c0_9, %c0_10] : memref<8x128xf32, #tpu.memory_space<vmem>>, vector<8x128xf32>
      %c0_11 = arith.constant 0 : index
      %c0_12 = arith.constant 0 : index
      %13 = vector.load %arg3[%c0_11, %c0_12] : memref<1x128xf32, #tpu.memory_space<vmem>>, vector<1x128xf32>
      %14 = vector.broadcast %13 : vector<1x128xf32> to vector<8x128xf32>
      %15 = arith.addf %12, %14 : vector<8x128xf32>
      %16 = math.tanh %15 : vector<8x128xf32>
      %c0_13 = arith.constant 0 : index
      %c0_14 = arith.constant 0 : index
      %17 = vector.load %arg4[%c0_13, %c0_14] : memref<8x128xf32, #tpu.memory_space<vmem>>, vector<8x128xf32>
      %18 = arith.mulf %16, %17 : vector<8x128xf32>
      %c0_15 = arith.constant 0 : index
      %c0_16 = arith.constant 0 : index
      %19 = vector.load %arg5[%c0_15, %c0_16] : memref<128x128xf32, #tpu.memory_space<vmem>>, vector<128x128xf32>
      %cst_17 = arith.constant dense<0.000000e+00> : vector<8x128xf32>
      %20 = tpu.matmul %18, %19, %cst_17 {dimension_numbers = #tpu.dot_dimension_numbers<[1], [0], [0], [1], [0, 0, 1, 1], [], []>} : vector<8x128xf32>, vector<128x128xf32>, vector<8x128xf32> -> vector<8x128xf32>
      %c0_18 = arith.constant 0 : index
      %c0_19 = arith.constant 0 : index
      %21 = vector.load %arg6[%c0_18, %c0_19] : memref<1x128xf32, #tpu.memory_space<vmem>>, vector<1x128xf32>
      %22 = vector.broadcast %21 : vector<1x128xf32> to vector<8x128xf32>
      %23 = arith.addf %20, %22 : vector<8x128xf32>
      %cst_20 = arith.constant dense<0.000000e+00> : vector<128xf32>
      %24 = vector.multi_reduction <add>, %23, %cst_20 [0] : vector<8x128xf32> to vector<128xf32>
      %25 = vector.shape_cast %24 : vector<128xf32> to vector<1x128xf32>
      %cst_21 = arith.constant 8.000000e+00 : f32
      %26 = vector.broadcast %cst_21 : f32 to vector<1x128xf32>
      %27 = arith.divf %25, %26 : vector<1x128xf32>
      %28 = vector.broadcast %27 : vector<1x128xf32> to vector<8x128xf32>
      %29 = arith.subf %23, %28 : vector<8x128xf32>
      %30 = arith.mulf %29, %29 : vector<8x128xf32>
      %cst_22 = arith.constant dense<0.000000e+00> : vector<128xf32>
      %31 = vector.multi_reduction <add>, %30, %cst_22 [0] : vector<8x128xf32> to vector<128xf32>
      %32 = vector.shape_cast %31 : vector<128xf32> to vector<1x128xf32>
      %cst_23 = arith.constant 8.000000e+00 : f32
      %33 = vector.broadcast %cst_23 : f32 to vector<1x128xf32>
      %34 = arith.divf %32, %33 : vector<1x128xf32>
      %35 = vector.broadcast %27 : vector<1x128xf32> to vector<8x128xf32>
      %36 = arith.subf %23, %35 : vector<8x128xf32>
      %cst_24 = arith.constant 9.99999974E-6 : f32
      %37 = vector.broadcast %cst_24 : f32 to vector<1x128xf32>
      %38 = arith.addf %34, %37 : vector<1x128xf32>
      %39 = math.rsqrt %38 : vector<1x128xf32>
      %40 = vector.broadcast %39 : vector<1x128xf32> to vector<8x128xf32>
      %41 = arith.mulf %36, %40 : vector<8x128xf32>
      %c0_25 = arith.constant 0 : index
      %c0_26 = arith.constant 0 : index
      %42 = vector.load %arg7[%c0_25, %c0_26] : memref<1x128xf32, #tpu.memory_space<vmem>>, vector<1x128xf32>
      %43 = vector.broadcast %42 : vector<1x128xf32> to vector<8x128xf32>
      %44 = arith.mulf %41, %43 : vector<8x128xf32>
      %c0_27 = arith.constant 0 : index
      %c0_28 = arith.constant 0 : index
      %45 = vector.load %arg8[%c0_27, %c0_28] : memref<1x128xf32, #tpu.memory_space<vmem>>, vector<1x128xf32>
      %46 = vector.broadcast %45 : vector<1x128xf32> to vector<8x128xf32>
      %47 = arith.addf %44, %46 : vector<8x128xf32>
      %cst_29 = arith.constant 0.000000e+00 : f32
      %48 = vector.broadcast %cst_29 : f32 to vector<8x128xf32>
      %49 = arith.maximumf %47, %48 : vector<8x128xf32>
      %50 = vector.broadcast %cst_29 : f32 to vector<8x128xf32>
      %51 = arith.subf %47, %50 : vector<8x128xf32>
      %52 = arith.cmpf one, %51, %51 : vector<8x128xf32>
      %53 = vector.broadcast %cst_29 : f32 to vector<8x128xf32>
      %54 = arith.addf %47, %53 : vector<8x128xf32>
      %55 = math.absf %51 : vector<8x128xf32>
      %cst_30 = arith.constant 0.000000e+00 : f32
      %56 = vector.broadcast %cst_30 : f32 to vector<8x128xf32>
      %57 = arith.subf %56, %55 : vector<8x128xf32>
      %58 = math.exp %57 : vector<8x128xf32>
      %59 = math.log1p %58 : vector<8x128xf32>
      %60 = arith.addf %49, %59 : vector<8x128xf32>
      %61 = arith.select %52, %54, %60 : vector<8x128xi1>, vector<8x128xf32>
      %cst_31 = arith.constant 0.000000e+00 : f32
      %62 = vector.broadcast %cst_31 : f32 to vector<8x128xf32>
      %63 = arith.maximumf %23, %62 : vector<8x128xf32>
      %64 = vector.broadcast %cst_31 : f32 to vector<8x128xf32>
      %65 = arith.subf %23, %64 : vector<8x128xf32>
      %66 = arith.cmpf one, %65, %65 : vector<8x128xf32>
      %67 = vector.broadcast %cst_31 : f32 to vector<8x128xf32>
      %68 = arith.addf %23, %67 : vector<8x128xf32>
      %69 = math.absf %65 : vector<8x128xf32>
      %cst_32 = arith.constant 0.000000e+00 : f32
      %70 = vector.broadcast %cst_32 : f32 to vector<8x128xf32>
      %71 = arith.subf %70, %69 : vector<8x128xf32>
      %72 = math.exp %71 : vector<8x128xf32>
      %73 = math.log1p %72 : vector<8x128xf32>
      %74 = arith.addf %63, %73 : vector<8x128xf32>
      %75 = arith.select %66, %68, %74 : vector<8x128xi1>, vector<8x128xf32>
      %cst_33 = arith.constant 1.000000e+00 : f32
      %76 = vector.broadcast %cst_33 : f32 to vector<8x128xf32>
      %77 = arith.addf %76, %75 : vector<8x128xf32>
      %78 = tpu.iota {dimensions = array<i32: 1>} : vector<8x128xi32>
      %c16_i32 = arith.constant 16 : i32
      %79 = vector.broadcast %c16_i32 : i32 to vector<8x128xi32>
      %80 = arith.cmpi slt, %78, %79 : vector<8x128xi32>
      %81 = arith.select %80, %61, %77 : vector<8x128xi1>, vector<8x128xf32>
      %c0_34 = arith.constant 0 : index
      %c0_35 = arith.constant 0 : index
      %82 = vector.load %arg9[%c0_34, %c0_35] : memref<8x128xf32, #tpu.memory_space<vmem>>, vector<8x128xf32>
      tpu.vector_store %arg9[%c0_34, %c0_35], %81 {strides = array<i32>} : memref<8x128xf32, #tpu.memory_space<vmem>>, vector<8x128xf32>,
    } else {
    }
    return
  }
  func.func @transform_0(%arg0: i32) -> (i32, i32) {
    %c0_i32 = arith.constant 0 : i32
    %c0_i32_0 = arith.constant 0 : i32
    return %c0_i32, %arg0 : i32, i32
  }
  func.func @transform_1(%arg0: i32) -> (i32, i32) {
    %c0_i32 = arith.constant 0 : i32
    %c0_i32_0 = arith.constant 0 : i32
    return %arg0, %c0_i32 : i32, i32
  }
  func.func @transform_2(%arg0: i32) -> (i32, i32) {
    %c0_i32 = arith.constant 0 : i32
    %c0_i32_0 = arith.constant 0 : i32
    %c0_i32_1 = arith.constant 0 : i32
    return %c0_i32, %c0_i32_0 : i32, i32
  }
  func.func @transform_3(%arg0: i32) -> (i32, i32) {
    %c0_i32 = arith.constant 0 : i32
    %c0_i32_0 = arith.constant 0 : i32
    %c0_i32_1 = arith.constant 0 : i32
    return %c0_i32, %c0_i32_0 : i32, i32
  }
  func.func @transform_4(%arg0: i32) -> (i32, i32) {
    %c0_i32 = arith.constant 0 : i32
    %c0_i32_0 = arith.constant 0 : i32
    %c0_i32_1 = arith.constant 0 : i32
    return %c0_i32, %c0_i32_0 : i32, i32
  }
  func.func @transform_5(%arg0: i32) -> (i32, i32) {
    %c0_i32 = arith.constant 0 : i32
    %c0_i32_0 = arith.constant 0 : i32
    %c0_i32_1 = arith.constant 0 : i32
    return %c0_i32, %c0_i32_0 : i32, i32
  }
  func.func @transform_6(%arg0: i32) -> (i32, i32) {
    %c0_i32 = arith.constant 0 : i32
    %c0_i32_0 = arith.constant 0 : i32
    %c0_i32_1 = arith.constant 0 : i32
    return %c0_i32, %c0_i32_0 : i32, i32
  }
  func.func @transform_7(%arg0: i32) -> (i32, i32) {
    %c0_i32 = arith.constant 0 : i32
    %c0_i32_0 = arith.constant 0 : i32
    %c0_i32_1 = arith.constant 0 : i32
    return %c0_i32, %c0_i32_0 : i32, i32
  }
  func.func @transform_8(%arg0: i32) -> (i32, i32) {
    %c0_i32 = arith.constant 0 : i32
    %c0_i32_0 = arith.constant 0 : i32
    %c0_i32_1 = arith.constant 0 : i32
    return %c0_i32, %c0_i32_0 : i32, i32
  }
}

</mosaic_0001>

<llo_original>
// kernel: tpu_custom_call.1
$region0: #{tpu_custom_call.1}
  #allocation0 [shape = 'u32[]', space=smem, size = 0x4, offset = 0x4, fixed_abs, tag = 'smem constant byte address 0x4 - core index']
  #allocation1 [shape = 'u32[72,128]{1,0:T(1,128)}', space=vmem, size = 0x9000, scoped, tag = 'internal scratch']
  #allocation2 [shape = 'f32[8,128]{1,0:T(8,128)}', space=vmem, size = 0x1000, scoped, tag = 'scratch operand']
  %s0 = inlined_call_operand.hbm [shape: bf16[8,512], index: 0, kind: input, shape index: {}]
  %s1 = inlined_call_operand.hbm [shape: bf16[512,128], index: 1, kind: input, shape index: {}]
  %s2 = inlined_call_operand.vmem [shape: f32[1,128], index: 2, kind: input, shape index: {}]
  %s3 = inlined_call_operand.hbm [shape: f32[8,128], index: 3, kind: input, shape index: {}]
  %s4 = inlined_call_operand.hbm [shape: f32[128,128], index: 4, kind: input, shape index: {}]
  %s5 = inlined_call_operand.vmem [shape: f32[1,128], index: 5, kind: input, shape index: {}]
  %s6 = inlined_call_operand.vmem [shape: f32[1,128], index: 6, kind: input, shape index: {}]
  %s7 = inlined_call_operand.vmem [shape: f32[1,128], index: 7, kind: input, shape index: {}]
  %s8 = inlined_call_operand.hbm [shape: f32[8,128], index: 8, kind: output, shape index: {}]
  %s9 = sld [smem:[#allocation0]]
  $region89: #{tpu_custom_call.1} parent=0
    _
  %s11 = ssub.s32 1, %s9
  %s12 = scalar_select 0, %s11, %s9
  $region1: #{tpu_custom_call.1} parent=0
    #allocation3 [shape = 'u8[8192]{0}', space=vmem, size = 0x2000, scoped, tag = 'input window, operand 0']
    #allocation4 [shape = 's32[2]{0}', space=sflag, size = 0x8, scoped, tag = 'scoped memory for tpu_custom_call.1']
    #allocation5 [shape = 's32[2]{0}', space=sflag, size = 0x8, scoped, tag = 'scoped memory for tpu_custom_call.1']
    #allocation6 [shape = 'u8[131072]{0}', space=vmem, size = 0x20000, scoped, tag = 'input window, operand 1']
    #allocation7 [shape = 's32[2]{0}', space=sflag, size = 0x8, scoped, tag = 'scoped memory for tpu_custom_call.1']
    #allocation8 [shape = 'u8[4096]{0}', space=vmem, size = 0x1000, scoped, tag = 'input window, operand 3, single buffered']
    #allocation9 [shape = 'u8[65536]{0}', space=vmem, size = 0x10000, scoped, tag = 'input window, operand 4, single buffered']
    #allocation10 [shape = 's32[1]{0}', space=sflag, size = 0x4, scoped, tag = 'scoped memory for tpu_custom_call.1']
    #allocation11 [shape = 'u8[4096]{0}', space=vmem, size = 0x1000, scoped, tag = 'output window, operand 0, single buffered']
    %13 = vsyncpa [#allocation4], 0
    %s14 = scalar_lea.sflag [#allocation4], 1
    %15 = vsyncpa %s14, 0
    %16 = vsyncpa [#allocation7], 0
    %s17 = scalar_lea.sflag [#allocation7], 1
    %18 = vsyncpa %s17, 0
    %19 = vsyncpa [#allocation10], 0
    %20 = vsyncpa [#allocation5], 0
    loop: start=0, step=1, limit=4
    $region2: #{tpu_custom_call.1} parent=1 // loop_pre_header
      _
    $region3: #{tpu_custom_call.1} parent=1 // loop_header
      %s22 = sphi 0, %s26
      %p23 = scmp.ge.s32.totalorder %s22, 4
      %s32 = sphi 0, %s34
      %s35 = sphi 0, %s32
      %s36 = sphi 0, %s35
      %s52 = sphi 0, %s36
      %s58 = sphi 0, %s60
      %s61 = sphi 0, %s58
      %s62 = sphi 0, %s61
      %s78 = sphi 0, %s62
      %s82 = sphi 0, %s82
      %s84 = sphi 0, %s82
      %s85 = sphi 0, %s84
      %s99 = sphi 0, %s85
      %s103 = sphi 0, %s103
      %s105 = sphi 0, %s103
      %s106 = sphi 0, %s105
      %s120 = sphi 0, %s106
      %s124 = sphi 0, %s124
      %s126 = sphi 0, %s124
      %s127 = sphi 0, %s126
      %s141 = sphi 0, %s127
      %s145 = sphi 0, %s145
      %s147 = sphi 0, %s145
      %s148 = sphi 0, %s147
      %s162 = sphi 0, %s148
      %s166 = sphi 0, %s166
      %s168 = sphi 0, %s166
      %s169 = sphi 0, %s168
      %s183 = sphi 0, %s169
      %s187 = sphi 0, %s187
      %s189 = sphi 0, %s187
      %s190 = sphi 0, %s189
      %s204 = sphi 0, %s190
      %s208 = sphi 0, %s208
      %s210 = sphi 0, %s208
      %s211 = sphi 0, %s210
      %s225 = sphi 0, %s211
    $region4: #{tpu_custom_call.1} parent=1 // loop_header_branch
      %25 = sbr.rel (%p23) target = $region8
    $region5: #{tpu_custom_call.1} parent=1 // loop_body
      %s27 = ssub.s32 %s22, 1
      %s28 = ssub.s32 %s22, 2
      %s29 = sadd.s32 %s22, 1
      %s30 = ssub.s32 %s22, %s29
      %p31 = scmp.eq.s32.totalorder %s30, 0
      %s33 = sadd.s32 %s32, 1
      %s34 = scalar_select %p31, %s32, %s33
      %p37 = pneg %p31
      %p38 = scmp.eq.s32.totalorder %s22, 1
      %p39 = por %p37, %p38
      %p40 = scmp.ne.s32.totalorder %s32, %s35
      %p41 = scmp.eq.s32.totalorder %s22, 0
      %p42 = por %p40, %p41
      %p43 = scmp.ne.s32.totalorder %s32, %s35
      %p44 = scmp.eq.s32.totalorder %s27, 1
      %p45 = por %p43, %p44
      %p46 = scmp.ne.s32.totalorder %s35, %s36
      %p47 = scmp.eq.s32.totalorder %s27, 0
      %p48 = por %p46, %p47
      %p49 = scmp.ne.s32.totalorder %s35, %s36
      %p50 = scmp.eq.s32.totalorder %s28, 1
      %p51 = por %p49, %p50
      %p53 = scmp.ne.s32.totalorder %s36, %s52
      %p54 = scmp.eq.s32.totalorder %s28, 0
      %p55 = por %p53, %p54
      %s56 = ssub.s32 %s22, %s29
      %p57 = scmp.eq.s32.totalorder %s56, 0
      %s59 = sadd.s32 %s58, 1
      %s60 = scalar_select %p57, %s58, %s59
      %p63 = pneg %p57
      %p64 = scmp.eq.s32.totalorder %s22, 1
      %p65 = por %p63, %p64
      %p66 = scmp.ne.s32.totalorder %s58, %s61
      %p67 = scmp.eq.s32.totalorder %s22, 0
      %p68 = por %p66, %p67
      %p69 = scmp.ne.s32.totalorder %s58, %s61
      %p70 = scmp.eq.s32.totalorder %s27, 1
      %p71 = por %p69, %p70
      %p72 = scmp.ne.s32.totalorder %s61, %s62
      %p73 = scmp.eq.s32.totalorder %s27, 0
      %p74 = por %p72, %p73
      %p75 = scmp.ne.s32.totalorder %s61, %s62
      %p76 = scmp.eq.s32.totalorder %s28, 1
      %p77 = por %p75, %p76
      %p79 = scmp.ne.s32.totalorder %s62, %s78
      %p80 = scmp.eq.s32.totalorder %s28, 0
      %p81 = por %p79, %p80
      %s83 = sadd.s32 %s82, 1
      %p86 = scmp.eq.s32.totalorder %s22, 1
      %p87 = scmp.ne.s32.totalorder %s82, %s84
      %p88 = scmp.eq.s32.totalorder %s22, 0
      %p89 = por %p87, %p88
      %p90 = scmp.ne.s32.totalorder %s82, %s84
      %p91 = scmp.eq.s32.totalorder %s27, 1
      %p92 = por %p90, %p91
      %p93 = scmp.ne.s32.totalorder %s84, %s85
      %p94 = scmp.eq.s32.totalorder %s27, 0
      %p95 = por %p93, %p94
      %p96 = scmp.ne.s32.totalorder %s84, %s85
      %p97 = scmp.eq.s32.totalorder %s28, 1
      %p98 = por %p96, %p97
      %p100 = scmp.ne.s32.totalorder %s85, %s99
      %p101 = scmp.eq.s32.totalorder %s28, 0
      %p102 = por %p100, %p101
      %s104 = sadd.s32 %s103, 1
      %p107 = scmp.eq.s32.totalorder %s22, 1
      %p108 = scmp.ne.s32.totalorder %s103, %s105
      %p109 = scmp.eq.s32.totalorder %s22, 0
      %p110 = por %p108, %p109
      %p111 = scmp.ne.s32.totalorder %s103, %s105
      %p112 = scmp.eq.s32.totalorder %s27, 1
      %p113 = por %p111, %p112
      %p114 = scmp.ne.s32.totalorder %s105, %s106
      %p115 = scmp.eq.s32.totalorder %s27, 0
      %p116 = por %p114, %p115
      %p117 = scmp.ne.s32.totalorder %s105, %s106
      %p118 = scmp.eq.s32.totalorder %s28, 1
      %p119 = por %p117, %p118
      %p121 = scmp.ne.s32.totalorder %s106, %s120
      %p122 = scmp.eq.s32.totalorder %s28, 0
      %p123 = por %p121, %p122
      %s125 = sadd.s32 %s124, 1
      %p128 = scmp.eq.s32.totalorder %s22, 1
      %p129 = scmp.ne.s32.totalorder %s124, %s126
      %p130 = scmp.eq.s32.totalorder %s22, 0
      %p131 = por %p129, %p130
      %p132 = scmp.ne.s32.totalorder %s124, %s126
      %p133 = scmp.eq.s32.totalorder %s27, 1
      %p134 = por %p132, %p133
      %p135 = scmp.ne.s32.totalorder %s126, %s127
      %p136 = scmp.eq.s32.totalorder %s27, 0
      %p137 = por %p135, %p136
      %p138 = scmp.ne.s32.totalorder %s126, %s127
      %p139 = scmp.eq.s32.totalorder %s28, 1
      %p140 = por %p138, %p139
      %p142 = scmp.ne.s32.totalorder %s127, %s141
      %p143 = scmp.eq.s32.totalorder %s28, 0
      %p144 = por %p142, %p143
      %s146 = sadd.s32 %s145, 1
      %p149 = scmp.eq.s32.totalorder %s22, 1
      %p150 = scmp.ne.s32.totalorder %s145, %s147
      %p151 = scmp.eq.s32.totalorder %s22, 0
      %p152 = por %p150, %p151
      %p153 = scmp.ne.s32.totalorder %s145, %s147
      %p154 = scmp.eq.s32.totalorder %s27, 1
      %p155 = por %p153, %p154
      %p156 = scmp.ne.s32.totalorder %s147, %s148
      %p157 = scmp.eq.s32.totalorder %s27, 0
      %p158 = por %p156, %p157
      %p159 = scmp.ne.s32.totalorder %s147, %s148
      %p160 = scmp.eq.s32.totalorder %s28, 1
      %p161 = por %p159, %p160
      %p163 = scmp.ne.s32.totalorder %s148, %s162
      %p164 = scmp.eq.s32.totalorder %s28, 0
      %p165 = por %p163, %p164
      %s167 = sadd.s32 %s166, 1
      %p170 = scmp.eq.s32.totalorder %s22, 1
      %p171 = scmp.ne.s32.totalorder %s166, %s168
      %p172 = scmp.eq.s32.totalorder %s22, 0
      %p173 = por %p171, %p172
      %p174 = scmp.ne.s32.totalorder %s166, %s168
      %p175 = scmp.eq.s32.totalorder %s27, 1
      %p176 = por %p174, %p175
      %p177 = scmp.ne.s32.totalorder %s168, %s169
      %p178 = scmp.eq.s32.totalorder %s27, 0
      %p179 = por %p177, %p178
      %p180 = scmp.ne.s32.totalorder %s168, %s169
      %p181 = scmp.eq.s32.totalorder %s28, 1
      %p182 = por %p180, %p181
      %p184 = scmp.ne.s32.totalorder %s169, %s183
      %p185 = scmp.eq.s32.totalorder %s28, 0
      %p186 = por %p184, %p185
      %s188 = sadd.s32 %s187, 1
      %p191 = scmp.eq.s32.totalorder %s22, 1
      %p192 = scmp.ne.s32.totalorder %s187, %s189
      %p193 = scmp.eq.s32.totalorder %s22, 0
      %p194 = por %p192, %p193
      %p195 = scmp.ne.s32.totalorder %s187, %s189
      %p196 = scmp.eq.s32.totalorder %s27, 1
      %p197 = por %p195, %p196
      %p198 = scmp.ne.s32.totalorder %s189, %s190
      %p199 = scmp.eq.s32.totalorder %s27, 0
      %p200 = por %p198, %p199
      %p201 = scmp.ne.s32.totalorder %s189, %s190
      %p202 = scmp.eq.s32.totalorder %s28, 1
      %p203 = por %p201, %p202
      %p205 = scmp.ne.s32.totalorder %s190, %s204
      %p206 = scmp.eq.s32.totalorder %s28, 0
      %p207 = por %p205, %p206
      %s209 = sadd.s32 %s208, 1
      %p212 = scmp.eq.s32.totalorder %s22, 1
      %p213 = scmp.ne.s32.totalorder %s208, %s210
      %p214 = scmp.eq.s32.totalorder %s22, 0
      %p215 = por %p213, %p214
      %p216 = scmp.ne.s32.totalorder %s208, %s210
      %p217 = scmp.eq.s32.totalorder %s27, 1
      %p218 = por %p216, %p217
      %p219 = scmp.ne.s32.totalorder %s210, %s211
      %p220 = scmp.eq.s32.totalorder %s27, 0
      %p221 = por %p219, %p220
      %p222 = scmp.ne.s32.totalorder %s210, %s211
      %p223 = scmp.eq.s32.totalorder %s28, 1
      %p224 = por %p222, %p223
      %p226 = scmp.ne.s32.totalorder %s211, %s225
      %p227 = scmp.eq.s32.totalorder %s28, 0
      %p228 = por %p226, %p227
      %p229 = scmp.le.s32.totalorder 1, %s22
      %p230 = scmp.lt.s32.totalorder %s22, 3
      %p231 = pnand %p229, %p230
      %p232 = pneg %p231
      // Predicated region
      $region9: #{tpu_custom_call.1} parent=5 // pred_check
        _
      $region10: #{tpu_custom_call.1} parent=5 // pred_check_branch
        %234 = sbr.rel (%p231) target = $region12
      $region11: #{tpu_custom_call.1} parent=5 // pred_region
        %s235 = ssub.s32 %s22, 1
        // Predicated region
        $region13: #{tpu_custom_call.1} parent=11 // pred_check
          %p236 = pneg %p95
        $region14: #{tpu_custom_call.1} parent=11 // pred_check_branch
          %238 = sbr.rel (%p236) target = $region16
        $region15: #{tpu_custom_call.1} parent=11 // pred_region
          _
        $region16: #{tpu_custom_call.1} parent=11 // pred_fallthru
          _
        // Predicated region
        $region17: #{tpu_custom_call.1} parent=11 // pred_check
          %p239 = pneg %p116
        $region18: #{tpu_custom_call.1} parent=11 // pred_check_branch
          %241 = sbr.rel (%p239) target = $region20
        $region19: #{tpu_custom_call.1} parent=11 // pred_region
          %243 = vsyncadd [#allocation7], 0
          %s245 = sshll.u32 %s3, 4
          %s246 = int_to_ptr.hbm [resolvable:$true] %s245
          %s247 = sshll.u32 [#allocation8], 4
          %s248 = int_to_ptr.vmem [resolvable:$true] %s247
          %250 = dma.hbm_to_vmem [thread:$0]  %s246, 128, %s248, [#allocation7]
        $region20: #{tpu_custom_call.1} parent=11 // pred_fallthru
          _
        // Predicated region
        $region21: #{tpu_custom_call.1} parent=11 // pred_check
          %p251 = pneg %p137
        $region22: #{tpu_custom_call.1} parent=11 // pred_check_branch
          %253 = sbr.rel (%p251) target = $region24
        $region23: #{tpu_custom_call.1} parent=11 // pred_region
          %255 = vsyncadd [#allocation10], 0
          %s256 = sshll.u32 %s4, 4
          %s257 = int_to_ptr.hbm [resolvable:$true] %s256
          %s258 = sshll.u32 [#allocation9], 4
          %s259 = int_to_ptr.vmem [resolvable:$true] %s258
          %264 = dma.hbm_to_vmem [thread:$0]  %s257, 2048, %s259, [#allocation10], 128, 128, 8
        $region24: #{tpu_custom_call.1} parent=11 // pred_fallthru
          _
        // Predicated region
        $region25: #{tpu_custom_call.1} parent=11 // pred_check
          %p265 = pneg %p158
        $region26: #{tpu_custom_call.1} parent=11 // pred_check_branch
          %267 = sbr.rel (%p265) target = $region28
        $region27: #{tpu_custom_call.1} parent=11 // pred_region
          _
        $region28: #{tpu_custom_call.1} parent=11 // pred_fallthru
          _
        // Predicated region
        $region29: #{tpu_custom_call.1} parent=11 // pred_check
          %p268 = pneg %p179
        $region30: #{tpu_custom_call.1} parent=11 // pred_check_branch
          %270 = sbr.rel (%p268) target = $region32
        $region31: #{tpu_custom_call.1} parent=11 // pred_region
          _
        $region32: #{tpu_custom_call.1} parent=11 // pred_fallthru
          _
        // Predicated region
        $region33: #{tpu_custom_call.1} parent=11 // pred_check
          %p271 = pneg %p200
        $region34: #{tpu_custom_call.1} parent=11 // pred_check_branch
          %273 = sbr.rel (%p271) target = $region36
        $region35: #{tpu_custom_call.1} parent=11 // pred_region
          _
        $region36: #{tpu_custom_call.1} parent=11 // pred_fallthru
          _
      $region12: #{tpu_custom_call.1} parent=5 // pred_fallthru
        _
      %p274 = scmp.lt.s32.totalorder %s22, 2
      // Predicated region
      $region37: #{tpu_custom_call.1} parent=5 // pred_check
        %p275 = pneg %p274
      $region38: #{tpu_custom_call.1} parent=5 // pred_check_branch
        %277 = sbr.rel (%p275) target = $region40
      $region39: #{tpu_custom_call.1} parent=5 // pred_region
        // Predicated region
        $region41: #{tpu_custom_call.1} parent=39 // pred_check
          %p278 = pneg %p42
        $region42: #{tpu_custom_call.1} parent=39 // pred_check_branch
          %280 = sbr.rel (%p278) target = $region44
        $region43: #{tpu_custom_call.1} parent=39 // pred_region
          %s281 = sand.u32 %s32, 1
          %s282 = scalar_lea.sflag [#allocation4], %s281
          %s283 = sand.u32 %s32, 1
          %s284 = smul.addr %s283, 8
          %s285 = scalar_lea.vmem [#allocation3], %s284
          %s286 = smul.u32 2, %s22
          %288 = vsyncadd %s282, 0
          %s289 = smul.addr %s286, 4
          %s290 = scalar_lea.hbm %s0, %s289
          %s292 = sshll.u32 %s290, 4
          %s293 = int_to_ptr.hbm [resolvable:$true] %s292
          %s294 = sshll.u32 %s285, 4
          %s295 = int_to_ptr.vmem [resolvable:$true] %s294
          %297 = dma.hbm_to_vmem [thread:$0]  %s293, 128, %s295, %s282
        $region44: #{tpu_custom_call.1} parent=39 // pred_fallthru
          _
        // Predicated region
        $region45: #{tpu_custom_call.1} parent=39 // pred_check
          %p298 = pneg %p68
        $region46: #{tpu_custom_call.1} parent=39 // pred_check_branch
          %300 = sbr.rel (%p298) target = $region48
        $region47: #{tpu_custom_call.1} parent=39 // pred_region
          %s301 = sand.u32 %s22, 1
          %s302 = scalar_lea.sflag [#allocation7], %s301
          %s303 = sand.u32 %s58, 1
          %s304 = smul.addr %s303, 128
          %s305 = scalar_lea.vmem [#allocation6], %s304
          %s306 = smul.u32 32, %s22
          %308 = vsyncadd %s302, 0
          %s309 = smul.addr %s306, 4
          %s310 = scalar_lea.hbm %s1, %s309
          %s311 = sshll.u32 %s310, 4
          %s312 = int_to_ptr.hbm [resolvable:$true] %s311
          %s313 = sshll.u32 %s305, 4
          %s314 = int_to_ptr.vmem [resolvable:$true] %s313
          %319 = dma.hbm_to_vmem [thread:$0]  %s312, 2048, %s314, %s302, 64, 64, 4
        $region48: #{tpu_custom_call.1} parent=39 // pred_fallthru
          _
      $region40: #{tpu_custom_call.1} parent=5 // pred_fallthru
        _
      %p320 = scmp.le.s32.totalorder 1, %s22
      %p321 = scmp.lt.s32.totalorder %s22, 3
      %p322 = pnand %p320, %p321
      %p323 = pneg %p322
      // Predicated region
      $region49: #{tpu_custom_call.1} parent=5 // pred_check
        _
      $region50: #{tpu_custom_call.1} parent=5 // pred_check_branch
        %325 = sbr.rel (%p322) target = $region52
      $region51: #{tpu_custom_call.1} parent=5 // pred_region
        %s326 = ssub.s32 %s22, 1
        %s327 = sand.u32 %s35, 1
        %s328 = scalar_lea.sflag [#allocation4], %s327
        %s329 = sand.u32 %s35, 1
        %s330 = smul.addr %s329, 8
        %s331 = scalar_lea.vmem [#allocation3], %s330
        // Predicated region
        $region53: #{tpu_custom_call.1} parent=51 // pred_check
          %p332 = pneg %p48
        $region54: #{tpu_custom_call.1} parent=51 // pred_check_branch
          %334 = sbr.rel (%p332) target = $region56
        $region55: #{tpu_custom_call.1} parent=51 // pred_region
          %336 = dma.done %s328, 128
        $region56: #{tpu_custom_call.1} parent=51 // pred_fallthru
          _
        %s337 = sand.u32 %s27, 1
        %s338 = scalar_lea.sflag [#allocation7], %s337
        %s339 = sand.u32 %s61, 1
        %s340 = smul.addr %s339, 128
        %s341 = scalar_lea.vmem [#allocation6], %s340
        // Predicated region
        $region57: #{tpu_custom_call.1} parent=51 // pred_check
          %p342 = pneg %p74
        $region58: #{tpu_custom_call.1} parent=51 // pred_check_branch
          %344 = sbr.rel (%p342) target = $region60
        $region59: #{tpu_custom_call.1} parent=51 // pred_region
          %346 = dma.done %s338, 2048
        $region60: #{tpu_custom_call.1} parent=51 // pred_fallthru
          _
        // Predicated region
        $region61: #{tpu_custom_call.1} parent=51 // pred_check
          %p347 = pneg %p116
        $region62: #{tpu_custom_call.1} parent=51 // pred_check_branch
          %349 = sbr.rel (%p347) target = $region64
        $region63: #{tpu_custom_call.1} parent=51 // pred_region
          %351 = dma.done [#allocation7], 128
        $region64: #{tpu_custom_call.1} parent=51 // pred_fallthru
          _
        // Predicated region
        $region65: #{tpu_custom_call.1} parent=51 // pred_check
          %p352 = pneg %p137
        $region66: #{tpu_custom_call.1} parent=51 // pred_check_branch
          %354 = sbr.rel (%p352) target = $region68
        $region67: #{tpu_custom_call.1} parent=51 // pred_region
          %356 = dma.done [#allocation10], 2048
        $region68: #{tpu_custom_call.1} parent=51 // pred_fallthru
          _
        %s357 = sand.u32 %s35, 1
        %s358 = scalar_lea.sflag [#allocation4], %s357
        %s359 = sand.u32 %s35, 1
        %s360 = smul.addr %s359, 8
        %s361 = scalar_lea.vmem [#allocation3], %s360
        %p362 = pneg %p48
        %p363 = pneg %p45
        %s364 = sand.u32 %s27, 1
        %s365 = scalar_lea.sflag [#allocation7], %s364
        %s366 = sand.u32 %s61, 1
        %s367 = smul.addr %s366, 128
        %s368 = scalar_lea.vmem [#allocation6], %s367
        %p369 = pneg %p74
        %p370 = pneg %p71
        %p371 = pneg %p95
        %p372 = pneg %p92
        %p373 = pneg %p116
        %p374 = pneg %p113
        %p375 = pneg %p137
        %p376 = pneg %p134
        %p377 = pneg %p158
        %p378 = pneg %p155
        %p379 = pneg %p179
        %p380 = pneg %p176
        %p381 = pneg %p200
        %p382 = pneg %p197
        %p383 = pneg %p221
        %p384 = pneg %p218
        %s385 = smul.u32 2, %s27
        %s386 = smul.u32 32, %s27
        %p387 = scmp.eq.s32.totalorder %s27, 0
        // Predicated region
        $region69: #{tpu_custom_call.1} parent=51 // pred_check
          %p388 = pneg %p387
        $region70: #{tpu_custom_call.1} parent=51 // pred_check_branch
          %390 = sbr.rel (%p388) target = $region72
        $region71: #{tpu_custom_call.1} parent=51 // pred_region
          %391 = vst [vmem:[#allocation2] sm:$0xff] 0.0
        $region72: #{tpu_custom_call.1} parent=51 // pred_fallthru
          _
        %v392 = vld [vmem:[#allocation2] sm:$0xff]
        %v393 = vld [vmem:[%s331] sm:$0xff]
        %v394 = vld [vmem:[%s341] sm:$0xf]
        %v395 = vld [vmem:[%s341 + $0x4] sm:$0xf]
        %v396 = vld [vmem:[%s341 + $0x8] sm:$0xf]
        %v397 = vld [vmem:[%s341 + $0xc] sm:$0xf]
        %v398 = vld [vmem:[%s341 + $0x10] sm:$0xf]
        %v399 = vld [vmem:[%s341 + $0x14] sm:$0xf]
        %v400 = vld [vmem:[%s341 + $0x18] sm:$0xf]
        %v401 = vld [vmem:[%s341 + $0x1c] sm:$0xf]
        %v402 = vld [vmem:[%s341 + $0x20] sm:$0xf]
        %v403 = vld [vmem:[%s341 + $0x24] sm:$0xf]
        %v404 = vld [vmem:[%s341 + $0x28] sm:$0xf]
        %v405 = vld [vmem:[%s341 + $0x2c] sm:$0xf]
        %v406 = vld [vmem:[%s341 + $0x30] sm:$0xf]
        %v407 = vld [vmem:[%s341 + $0x34] sm:$0xf]
        %v408 = vld [vmem:[%s341 + $0x38] sm:$0xf]
        %v409 = vld [vmem:[%s341 + $0x3c] sm:$0xf]
        %v410 = vld [vmem:[%s341 + $0x40] sm:$0xf]
        %v411 = vld [vmem:[%s341 + $0x44] sm:$0xf]
        %v412 = vld [vmem:[%s341 + $0x48] sm:$0xf]
        %v413 = vld [vmem:[%s341 + $0x4c] sm:$0xf]
        %v414 = vld [vmem:[%s341 + $0x50] sm:$0xf]
        %v415 = vld [vmem:[%s341 + $0x54] sm:$0xf]
        %v416 = vld [vmem:[%s341 + $0x58] sm:$0xf]
        %v417 = vld [vmem:[%s341 + $0x5c] sm:$0xf]
        %v418 = vld [vmem:[%s341 + $0x60] sm:$0xf]
        %v419 = vld [vmem:[%s341 + $0x64] sm:$0xf]
        %v420 = vld [vmem:[%s341 + $0x68] sm:$0xf]
        %v421 = vld [vmem:[%s341 + $0x6c] sm:$0xf]
        %v422 = vld [vmem:[%s341 + $0x70] sm:$0xf]
        %v423 = vld [vmem:[%s341 + $0x74] sm:$0xf]
        %v424 = vld [vmem:[%s341 + $0x78] sm:$0xf]
        %v425 = vld [vmem:[%s341 + $0x7c] sm:$0xf]
        %v427 = vunpack.c.l.b16 %v393
        %v428 = vunpack.c.h.b16 %v393
        %v429 = vpack.c.b16 %v427, %v427
        %v430 = vpack.c.b16 %v428, %v428
        %v465 = vunpack.c.l.b16 %v394
        %v466 = vunpack.c.l.b16 %v395
        %v467 = vunpack.c.l.b16 %v396
        %v468 = vunpack.c.l.b16 %v397
        %v469 = vunpack.c.l.b16 %v398
        %v470 = vunpack.c.l.b16 %v399
        %v471 = vunpack.c.l.b16 %v400
        %v472 = vunpack.c.l.b16 %v401
        %v473 = vunpack.c.l.b16 %v402
        %v474 = vunpack.c.l.b16 %v403
        %v475 = vunpack.c.l.b16 %v404
        %v476 = vunpack.c.l.b16 %v405
        %v477 = vunpack.c.l.b16 %v406
        %v478 = vunpack.c.l.b16 %v407
        %v479 = vunpack.c.l.b16 %v408
        %v480 = vunpack.c.l.b16 %v409
        %v481 = vunpack.c.l.b16 %v410
        %v482 = vunpack.c.l.b16 %v411
        %v483 = vunpack.c.l.b16 %v412
        %v484 = vunpack.c.l.b16 %v413
        %v485 = vunpack.c.l.b16 %v414
        %v486 = vunpack.c.l.b16 %v415
        %v487 = vunpack.c.l.b16 %v416
        %v488 = vunpack.c.l.b16 %v417
        %v489 = vunpack.c.l.b16 %v418
        %v490 = vunpack.c.l.b16 %v419
        %v491 = vunpack.c.l.b16 %v420
        %v492 = vunpack.c.l.b16 %v421
        %v493 = vunpack.c.l.b16 %v422
        %v494 = vunpack.c.l.b16 %v423
        %v495 = vunpack.c.l.b16 %v424
        %v496 = vunpack.c.l.b16 %v425
        %v497 = vpack.c.b16 %v466, %v465
        %v498 = vpack.c.b16 %v468, %v467
        %v499 = vpack.c.b16 %v470, %v469
        %v500 = vpack.c.b16 %v472, %v471
        %v501 = vpack.c.b16 %v474, %v473
        %v502 = vpack.c.b16 %v476, %v475
        %v503 = vpack.c.b16 %v478, %v477
        %v504 = vpack.c.b16 %v480, %v479
        %v505 = vpack.c.b16 %v482, %v481
        %v506 = vpack.c.b16 %v484, %v483
        %v507 = vpack.c.b16 %v486, %v485
        %v508 = vpack.c.b16 %v488, %v487
        %v509 = vpack.c.b16 %v490, %v489
        %v510 = vpack.c.b16 %v492, %v491
        %v511 = vpack.c.b16 %v494, %v493
        %v512 = vpack.c.b16 %v496, %v495
        %529 = vmatpush.bf16.msra.mxu0 %v504
        %530 = vmatpush.bf16.msra.mxu0 %v503
        %531 = vmatpush.bf16.msra.mxu0 %v502
        %532 = vmatpush.bf16.msra.mxu0 %v501
        %533 = vmatpush.bf16.msra.mxu0 %v500
        %534 = vmatpush.bf16.msra.mxu0 %v499
        %535 = vmatpush.bf16.msra.mxu0 %v498
        %536 = vmatpush.bf16.msra.mxu0 %v497
        %537 = vmatmul.bf16.gmra.mxu0 %v429
        %v538 = vpop.f32.mrf.mxu0
        %v539 = vadd.f32 0.0, %v538
        %v540 = vpop.f32.mrf.mxu0
        %541 = vdwg.mxu0
        %542 = vmatpush.bf16.msra.mxu0 %v512
        %543 = vmatpush.bf16.msra.mxu0 %v511
        %544 = vmatpush.bf16.msra.mxu0 %v510
        %545 = vmatpush.bf16.msra.mxu0 %v509
        %546 = vmatpush.bf16.msra.mxu0 %v508
        %547 = vmatpush.bf16.msra.mxu0 %v507
        %548 = vmatpush.bf16.msra.mxu0 %v506
        %549 = vmatpush.bf16.msra.mxu0 %v505
        %550 = vmatmul.bf16.gmra.mxu0 %v430
        %v551 = vpop.f32.mrf.mxu0
        %v552 = vadd.f32 %v539, %v551
        %v553 = vpop.f32.mrf.mxu0
        %554 = vdwg.mxu0
        %v555 = vadd.f32 %v392, %v552
        %556 = vst [vmem:[#allocation2] sm:$0xff] %v555
        %p557 = scmp.eq.s32.totalorder %s27, 1
        // Predicated region
        $region73: #{tpu_custom_call.1} parent=51 // pred_check
          %p558 = pneg %p557
        $region74: #{tpu_custom_call.1} parent=51 // pred_check_branch
          %560 = sbr.rel (%p558) target = $region76
        $region75: #{tpu_custom_call.1} parent=51 // pred_region
          %v561 = vld [vmem:[#allocation2] sm:$0xff]
          %v562 = vld [vmem:[%s2] sm:$0x1]
          %v564 = vperm.slane %v562, 0
          %v566 = vadd.f32 %v561, %v564
          %v567 = vtanh.pop %v566
          %v568 = vld [vmem:[#allocation8] sm:$0xff]
          %v569 = vmul.f32 %v567, %v568
          %v570 = vld [vmem:[#allocation9] sm:$0xff]
          %v571 = vld [vmem:[#allocation9 + $0x8] sm:$0xff]
          %v572 = vld [vmem:[#allocation9 + $0x10] sm:$0xff]
          %v573 = vld [vmem:[#allocation9 + $0x18] sm:$0xff]
          %v574 = vld [vmem:[#allocation9 + $0x20] sm:$0xff]
          %v575 = vld [vmem:[#allocation9 + $0x28] sm:$0xff]
          %v576 = vld [vmem:[#allocation9 + $0x30] sm:$0xff]
          %v577 = vld [vmem:[#allocation9 + $0x38] sm:$0xff]
          %v578 = vld [vmem:[#allocation9 + $0x40] sm:$0xff]
          %v579 = vld [vmem:[#allocation9 + $0x48] sm:$0xff]
          %v580 = vld [vmem:[#allocation9 + $0x50] sm:$0xff]
          %v581 = vld [vmem:[#allocation9 + $0x58] sm:$0xff]
          %v582 = vld [vmem:[#allocation9 + $0x60] sm:$0xff]
          %v583 = vld [vmem:[#allocation9 + $0x68] sm:$0xff]
          %v584 = vld [vmem:[#allocation9 + $0x70] sm:$0xff]
          %v585 = vld [vmem:[#allocation9 + $0x78] sm:$0xff]
          %v586 = vld [vmem:[%s5] sm:$0x1]
          %v588 = vperm.slane %v586, 0
          %590 = vmatpush.msra.mxu0 %v585
          %591 = vmatpush.msra.mxu0 %v584
          %592 = vmatpush.msra.mxu0 %v583
          %593 = vmatpush.msra.mxu0 %v582
          %594 = vmatpush.msra.mxu0 %v581
          %595 = vmatpush.msra.mxu0 %v580
          %596 = vmatpush.msra.mxu0 %v579
          %597 = vmatpush.msra.mxu0 %v578
          %598 = vmatpush.msra.mxu0 %v577
          %599 = vmatpush.msra.mxu0 %v576
          %600 = vmatpush.msra.mxu0 %v575
          %601 = vmatpush.msra.mxu0 %v574
          %602 = vmatpush.msra.mxu0 %v573
          %603 = vmatpush.msra.mxu0 %v572
          %604 = vmatpush.msra.mxu0 %v571
          %605 = vmatpush.msra.mxu0 %v570
          %606 = vmatmul.f32.gmra.mxu0 %v569
          %v607 = vpop.f32.mrf.mxu0
          %v608 = vadd.f32 %v588, %v607
          %609 = vdwg.mxu0
          %v610 = vrot.slane %v608, 4
          %v611 = vadd.f32 %v608, %v610
          %v612 = vrot.slane %v611, 2
          %v613 = vadd.f32 %v611, %v612
          %v614 = vrot.slane %v613, 1
          %v615 = vadd.f32 %v613, %v614
          %v616 = vrcp.pop 8.0
          %v617 = vmul.f32 8.0, %v616
          %v618 = vsub.f32 1.0, %v617
          %v619 = vmul.f32 %v616, %v618
          %v620 = vadd.f32 %v616, %v619
          %vm621 = vweird.f32 %v616
          %v622 = vsel %vm621, %v616, %v620
          %v623 = vmul.f32 %v615, %v622
          %v624 = vsub.f32 %v608, %v623
          %v625 = vmul.f32 %v624, %v624
          %v626 = vrot.slane %v625, 4
          %v627 = vadd.f32 %v625, %v626
          %v628 = vrot.slane %v627, 2
          %v629 = vadd.f32 %v627, %v628
          %v630 = vrot.slane %v629, 1
          %v631 = vadd.f32 %v629, %v630
          %v632 = vmul.f32 %v631, %v622
          %v633 = vadd.f32 %v632, 1e-05
          %v634 = vrsqrt.pop %v633
          %v635 = vmul.f32 %v634, %v633
          %v636 = vmul.f32 %v635, %v634
          %v637 = vmul.f32 0.5, %v636
          %v638 = vsub.f32 1.5, %v637
          %v639 = vmul.f32 %v634, %v638
          %vm640 = vweird.f32 %v633
          %vm641 = vweird.f32 %v634
          %vm642 = vmor %vm640, %vm641
          %v643 = vsel %vm642, %v634, %v639
          %v644 = vmul.f32 %v624, %v643
          %v645 = vld [vmem:[%s6] sm:$0x1]
          %v647 = vperm.slane %v645, 0
          %v649 = vmul.f32 %v644, %v647
          %v650 = vld [vmem:[%s7] sm:$0x1]
          %v652 = vperm.slane %v650, 0
          %v654 = vadd.f32 %v649, %v652
          %v655 = vmax.f32 %v654, 0.0
          %vm656 = vcmp.ne.f32.partialorder %v654, %v654
          %v657 = vadd.f32 %v654, 0.0
          %v658 = vand.u32 2147483647, %v654
          %v659 = vsub.f32 0.0, %v658
          %v660 = vmul.f32 %v659, 1.442695
          %v661 = vpow.pop %v660
          %v662 = vadd.f32 %v661, 1.0
          %v663 = vlog2.pop %v662
          %v664 = vmul.f32 %v663, 0.6931472
          %v665 = vmul.f32 -0.5, %v661
          %v666 = vadd.f32 %v665, 1.0
          %v667 = vmul.f32 %v666, %v661
          %v668 = vand.u32 2147483647, %v661
          %vm669 = vcmp.lt.f32.partialorder %v668, 0.0004427343
          %v670 = vsel %vm669, %v667, %v664
          %v671 = vadd.f32 %v655, %v670
          %v672 = vsel %vm656, %v657, %v671
          %v673 = vmax.f32 %v608, 0.0
          %vm674 = vcmp.ne.f32.partialorder %v608, %v608
          %v675 = vadd.f32 %v608, 0.0
          %v676 = vand.u32 2147483647, %v608
          %v677 = vsub.f32 0.0, %v676
          %v678 = vmul.f32 %v677, 1.442695
          %v679 = vpow.pop %v678
          %v680 = vadd.f32 %v679, 1.0
          %v681 = vlog2.pop %v680
          %v682 = vmul.f32 %v681, 0.6931472
          %v683 = vmul.f32 -0.5, %v679
          %v684 = vadd.f32 %v683, 1.0
          %v685 = vmul.f32 %v684, %v679
          %v686 = vand.u32 2147483647, %v679
          %vm687 = vcmp.lt.f32.partialorder %v686, 0.0004427343
          %v688 = vsel %vm687, %v685, %v682
          %v689 = vadd.f32 %v673, %v688
          %v690 = vsel %vm674, %v675, %v689
          %v691 = vadd.f32 %v690, 1.0
          %v692 = vlaneseq
          %v693 = vand.u32 %v692, 127
          %vm694 = vcmp.lt.s32.totalorder %v693, 16
          %v695 = vsel %vm694, %v672, %v691
          %696 = vst [vmem:[#allocation11] sm:$0xff] %v695
        $region76: #{tpu_custom_call.1} parent=51 // pred_fallthru
          _
        // Predicated region
        $region77: #{tpu_custom_call.1} parent=51 // pred_check
          %p697 = pneg %p218
        $region78: #{tpu_custom_call.1} parent=51 // pred_check_branch
          %699 = sbr.rel (%p697) target = $region80
        $region79: #{tpu_custom_call.1} parent=51 // pred_region
          %701 = vsyncadd [#allocation5], 0
          %s703 = sshll.u32 [#allocation11], 4
          %s704 = int_to_ptr.vmem [resolvable:$true] %s703
          %s705 = sshll.u32 %s8, 4
          %s706 = int_to_ptr.hbm [resolvable:$true] %s705
          %708 = dma.vmem_to_hbm [thread:$0]  %s704, 128, %s706, [#allocation5]
        $region80: #{tpu_custom_call.1} parent=51 // pred_fallthru
          _
        // Predicated region
        $region81: #{tpu_custom_call.1} parent=51 // pred_check
          %p709 = pneg %p218
        $region82: #{tpu_custom_call.1} parent=51 // pred_check_branch
          %711 = sbr.rel (%p709) target = $region84
        $region83: #{tpu_custom_call.1} parent=51 // pred_region
          %713 = dma.done [#allocation5], 128
        $region84: #{tpu_custom_call.1} parent=51 // pred_fallthru
          _
      $region52: #{tpu_custom_call.1} parent=5 // pred_fallthru
        _
      %p714 = scmp.le.s32.totalorder 2, %s22
      // Predicated region
      $region85: #{tpu_custom_call.1} parent=5 // pred_check
        %p715 = pneg %p714
      $region86: #{tpu_custom_call.1} parent=5 // pred_check_branch
        %717 = sbr.rel (%p715) target = $region88
      $region87: #{tpu_custom_call.1} parent=5 // pred_region
        %s718 = ssub.s32 %s22, 2
      $region88: #{tpu_custom_call.1} parent=5 // pred_fallthru
        _
    $region6: #{tpu_custom_call.1} parent=1 // loop_footer
      %s26 = sadd.s32 1, %s22
    $region7: #{tpu_custom_call.1} parent=1 // loop_footer_branch
      %21 = sbr.rel target = $region3
    $region8: #{tpu_custom_call.1} parent=1 // loop_exit
      _
    %719 = vsyncpa [#allocation4], 1
    %s720 = scalar_lea.sflag [#allocation4], 1
    %721 = vsyncpa %s720, 1
    %722 = vsyncpa [#allocation7], 1
    %s723 = scalar_lea.sflag [#allocation7], 1
    %724 = vsyncpa %s723, 1
    %725 = vsyncpa [#allocation10], 1
    %726 = vsyncpa [#allocation5], 1
    %s727 = scalar_lea.sflag [#allocation5], 1
    %728 = vsyncpa %s727, 1

</llo_original>
